<compile_context>
chip_gen: v7x
topology: tpu7x:2x2x1
jax: 0.10.0
libtpu: 0.0.40
codegen_flags: <defaults>
</compile_context>

<pallas_src>
import functools

import jax
import jax.numpy as jnp
from jax.experimental import pallas as pl
from jax.experimental.pallas import tpu as pltpu

INPUT_DIM = 1
OUTPUT_DIM = 1

LANE = 128                       # TPU lane width (last dim of the lane-dense slab)
TM_MAX = 8192                    # max tile rows: 8192 * 128 * 4B = 4 MiB per buffer
VMEM_LIMIT_BYTES = 32 * 1024 * 1024  # in(2x4MiB) + out(2x4MiB) = 16 MiB << 32 MiB


def linreg_kernel(x_ref, w_ref, b_ref, o_ref):
    # x_ref: (tm, 128) VMEM tile of the lane-dense input slab
    # w_ref, b_ref: (1, 1) SMEM scalars
    # o_ref: (tm, 128) VMEM output tile (HBM-aliased with the input slab)
    w = w_ref[0, 0]
    b = b_ref[0, 0]
    # Pure VPU elementwise FMA; no MXU, no transpose.
    o_ref[...] = x_ref[...] * w + b


@functools.partial(jax.jit, static_argnames=("tm_max",))
def linear_regression_forward(x, w, b, *, tm_max=TM_MAX):
    """x: (N, INPUT_DIM) f32, w: (OUTPUT_DIM, INPUT_DIM) f32, b: (OUTPUT_DIM,) f32."""
    assert x.ndim == 2 and x.shape[1] == INPUT_DIM
    assert w.shape == (OUTPUT_DIM, INPUT_DIM) and b.shape == (OUTPUT_DIM,)
    assert tm_max % 8 == 0
    n = x.shape[0]

    # --- lane-dense slab: flatten (N,1) -> (N,), round up to a whole (8,128) tile ---
    flat = x.reshape(-1).astype(jnp.float32)           # length N (INPUT_DIM == 1)
    total = flat.shape[0]
    m8 = ((pl.cdiv(total, LANE) + 7) // 8) * 8          # slab rows, multiple of 8
    padded = m8 * LANE                                   # pad <= 1023 elements
    if padded != total:
        flat = jnp.pad(flat, (0, padded - total))        # skipped when N % 1024 == 0
    slab = flat.reshape(m8, LANE)

    tm = min(tm_max, m8)                                 # tile rows (multiple of 8)
    grid = (pl.cdiv(m8, tm),)                            # ragged final block is masked

    w_s = w.reshape(1, 1).astype(jnp.float32)
    b_s = b.reshape(1, 1).astype(jnp.float32)

    out_slab = pl.pallas_call(
        linreg_kernel,
        out_shape=jax.ShapeDtypeStruct((m8, LANE), jnp.float32),
        grid=grid,
        in_specs=[
            pl.BlockSpec((tm, LANE), lambda i: (i, 0)),            # x tile (VMEM)
            pl.BlockSpec(memory_space=pltpu.MemorySpace.SMEM),     # w scalar
            pl.BlockSpec(memory_space=pltpu.MemorySpace.SMEM),     # b scalar
        ],
        out_specs=pl.BlockSpec((tm, LANE), lambda i: (i, 0)),
        input_output_aliases={0: 0},                               # write y over the slab
        cost_estimate=pl.CostEstimate(
            flops=2 * m8 * LANE,
            bytes_accessed=2 * m8 * LANE * 4,
            transcendentals=0,
        ),
        compiler_params=pltpu.CompilerParams(
            dimension_semantics=("parallel",),
            vmem_limit_bytes=VMEM_LIMIT_BYTES,
        ),
    )(slab, w_s, b_s)

    # Restore the (N, OUTPUT_DIM) layout; free reshape when no padding was added.
    if padded == total:
        return out_slab.reshape(n, OUTPUT_DIM)
    return out_slab.reshape(-1)[:total].reshape(n, OUTPUT_DIM)


if __name__ == "__main__":
    key = jax.random.PRNGKey(0)
    kx, kw, kb = jax.random.split(key, 3)

    # Mimic nn.Linear's U(-1/sqrt(in), 1/sqrt(in)) init
    bound = 1.0 / (INPUT_DIM ** 0.5)
    w = jax.random.uniform(kw, (OUTPUT_DIM, INPUT_DIM), jnp.float32,
                           minval=-bound, maxval=bound)
    b = jax.random.uniform(kb, (OUTPUT_DIM,), jnp.float32,
                           minval=-bound, maxval=bound)

    # Small batch consistent with x: (N, input_dim=1)
    N = 8
    x = jax.random.normal(kx, (N, INPUT_DIM), dtype=jnp.float32)
    y = linear_regression_forward(x, w, b)
    jax.block_until_ready(y)
    y_ref = x @ w.T + b
    assert y.shape == (N, OUTPUT_DIM)
    assert jnp.allclose(y, y_ref, atol=1e-5, rtol=1e-5)

    # Batch that does not divide 1024: exercises the minimal tail-pad + de-pad path.
    N2 = 5000
    x2 = jax.random.normal(kx, (N2, INPUT_DIM), dtype=jnp.float32)
    y2 = linear_regression_forward(x2, w, b)
    jax.block_until_ready(y2)
    assert jnp.allclose(y2, x2 @ w.T + b, atol=1e-5, rtol=1e-5)

    # Zero-copy fast path: N % 1024 == 0 -> no pad, no de-pad slice around the kernel.
    N3 = 2048
    x3 = jax.random.normal(kx, (N3, INPUT_DIM), dtype=jnp.float32)
    y3 = linear_regression_forward(x3, w, b)
    jax.block_until_ready(y3)
    assert jnp.allclose(y3, x3 @ w.T + b, atol=1e-5, rtol=1e-5)

    # Multi-tile grid with a ragged final block (small tm_max to exercise it at small N):
    # m8 = 40 rows, tm = 16 -> grid = 3, last block has 8 valid rows out of 16.
    y2b = linear_regression_forward(x2, w, b, tm_max=16)
    jax.block_until_ready(y2b)
    assert jnp.allclose(y2b, x2 @ w.T + b, atol=1e-5, rtol=1e-5)

    print("KERNEL_OK")
</pallas_src>

<mosaic_0001>
module attributes {stable_mosaic.version = 11 : i64} {
  func.func @linreg_kernel(%arg0: i32, %arg1: memref<8x128xf32, #tpu.memory_space<vmem>>, %arg2: memref<1x1xf32, #tpu.memory_space<smem>>, %arg3: memref<1x1xf32, #tpu.memory_space<smem>>, %arg4: memref<8x128xf32, #tpu.memory_space<vmem>>) attributes {dimension_semantics = [#tpu.dimension_semantics<parallel>], iteration_bounds = array<i64: 1>, scalar_prefetch = 0 : i64, scratch_operands = 0 : i64, tpu.core_type = #tpu.core_type<tc>, window_params = [{transform_indices = @transform_0, window_bounds = array<i64: 8, 128>}, {transform_indices = @transform_1, window_bounds = array<i64: 1, 1>}, {transform_indices = @transform_2, window_bounds = array<i64: 1, 1>}, {transform_indices = @transform_3, window_bounds = array<i64: 8, 128>}]} {
    %c0 = arith.constant 0 : index
    %c0_0 = arith.constant 0 : index
    %0 = memref.load %arg2[%c0, %c0_0] : memref<1x1xf32, #tpu.memory_space<smem>>
    %c0_1 = arith.constant 0 : index
    %c0_2 = arith.constant 0 : index
    %1 = memref.load %arg3[%c0_1, %c0_2] : memref<1x1xf32, #tpu.memory_space<smem>>
    %c0_3 = arith.constant 0 : index
    %c0_4 = arith.constant 0 : index
    %2 = vector.load %arg1[%c0_3, %c0_4] : memref<8x128xf32, #tpu.memory_space<vmem>>, vector<8x128xf32>
    %3 = vector.broadcast %0 : f32 to vector<8x128xf32>
    %4 = arith.mulf %2, %3 : vector<8x128xf32>
    %5 = vector.broadcast %1 : f32 to vector<8x128xf32>
    %6 = arith.addf %4, %5 : vector<8x128xf32>
    %c0_5 = arith.constant 0 : index
    %c0_6 = arith.constant 0 : index
    %7 = vector.load %arg4[%c0_5, %c0_6] : memref<8x128xf32, #tpu.memory_space<vmem>>, vector<8x128xf32>
    tpu.vector_store %arg4[%c0_5, %c0_6], %6 {strides = array<i32>} : memref<8x128xf32, #tpu.memory_space<vmem>>, vector<8x128xf32>,
    return
  }
  func.func @transform_0(%arg0: i32) -> (i32, i32) {
    %c0_i32 = arith.constant 0 : i32
    %c0_i32_0 = arith.constant 0 : i32
    return %arg0, %c0_i32 : i32, i32
  }
  func.func @transform_1(%arg0: i32) -> (i32, i32) {
    %c0_i32 = arith.constant 0 : i32
    %c0_i32_0 = arith.constant 0 : i32
    %c0_i32_1 = arith.constant 0 : i32
    return %c0_i32, %c0_i32_0 : i32, i32
  }
  func.func @transform_2(%arg0: i32) -> (i32, i32) {
    %c0_i32 = arith.constant 0 : i32
    %c0_i32_0 = arith.constant 0 : i32
    %c0_i32_1 = arith.constant 0 : i32
    return %c0_i32, %c0_i32_0 : i32, i32
  }
  func.func @transform_3(%arg0: i32) -> (i32, i32) {
    %c0_i32 = arith.constant 0 : i32
    %c0_i32_0 = arith.constant 0 : i32
    return %arg0, %c0_i32 : i32, i32
  }
}

</mosaic_0001>

<llo_original>
// kernel: linear_regression_forward.1
$region0: #{linear_regression_forward.1}
  #allocation0 [shape = 'u32[]', space=smem, size = 0x4, offset = 0x4, fixed_abs, tag = 'smem constant byte address 0x4 - core index']
  #allocation1 [shape = 'u32[144,128]{1,0:T(1,128)}', space=vmem, size = 0x12000, scoped, tag = 'internal scratch']
  #allocation2 [shape = 'f32[1,1]{1,0:T(1,128)S(6)}', space=smem, size = 0x200, scoped, tag = 'scoped memory for linear_regression_forward.1']
  #allocation3 [shape = 'f32[1,1]{1,0:T(1,128)S(6)}', space=smem, size = 0x200, scoped, tag = 'scoped memory for linear_regression_forward.1']
  %s0 = inlined_call_operand.vmem [shape: f32[8,128], index: 0, kind: input, shape index: {}, may-alias: {0,3}]
  %s1 = inlined_call_operand.<no memory space> [shape: f32[1,1], index: 1, kind: input, shape index: {}]
  %s2 = inlined_call_operand.<no memory space> [shape: f32[1,1], index: 2, kind: input, shape index: {}]
  %s3 = inlined_call_operand.vmem [shape: f32[8,128], index: 3, kind: output, shape index: {}, may-alias: {0,3}]
  %s4 = sld [smem:[#allocation0]]
  $region22: #{linear_regression_forward.1} parent=0
    _
  %s6 = ssub.s32 1, %s4
  %s7 = scalar_select 0, %s6, %s4
  %8 = sst [smem:[#allocation2]] %s1
  %9 = sst [smem:[#allocation3]] %s2
  // Predicated region
  $region2: #{linear_regression_forward.1} parent=0 // pred_check
    _
  $region3: #{linear_regression_forward.1} parent=0 // pred_check_branch
    %11 = sbr.rel (0) target = $region5
  $region4: #{linear_regression_forward.1} parent=0 // pred_region
    _
  $region5: #{linear_regression_forward.1} parent=0 // pred_fallthru
    _
  // Predicated region
  $region6: #{linear_regression_forward.1} parent=0 // pred_check
    _
  $region7: #{linear_regression_forward.1} parent=0 // pred_check_branch
    %13 = sbr.rel (0) target = $region9
  $region8: #{linear_regression_forward.1} parent=0 // pred_region
    _
  $region9: #{linear_regression_forward.1} parent=0 // pred_fallthru
    _
  // Predicated region
  $region10: #{linear_regression_forward.1} parent=0 // pred_check
    _
  $region11: #{linear_regression_forward.1} parent=0 // pred_check_branch
    %15 = sbr.rel (0) target = $region13
  $region12: #{linear_regression_forward.1} parent=0 // pred_region
    _
  $region13: #{linear_regression_forward.1} parent=0 // pred_fallthru
    _
  %s16 = sld [smem:[#allocation2]]
  %s17 = sld [smem:[#allocation3]]
  %v18 = vld [vmem:[%s0] sm:$0xff]
  %v19 = vstv %s16
  %v20 = vmul.f32 %v18, %v19
  %v21 = vstv %s17
  %v22 = vadd.f32 %v20, %v21
  %23 = vst [vmem:[%s3] sm:$0xff] %v22
  // Predicated region
  $region14: #{linear_regression_forward.1} parent=0 // pred_check
    _
  $region15: #{linear_regression_forward.1} parent=0 // pred_check_branch
    %25 = sbr.rel (0) target = $region17
  $region16: #{linear_regression_forward.1} parent=0 // pred_region
    _
  $region17: #{linear_regression_forward.1} parent=0 // pred_fallthru
    _
  // Predicated region
  $region18: #{linear_regression_forward.1} parent=0 // pred_check
    _
  $region19: #{linear_regression_forward.1} parent=0 // pred_check_branch
    %27 = sbr.rel (0) target = $region21
  $region20: #{linear_regression_forward.1} parent=0 // pred_region
    _
  $region21: #{linear_regression_forward.1} parent=0 // pred_fallthru
    _

</llo_original>
